<compile_context>
chip_gen: v7x
topology: tpu7x:2x2x1
jax: 0.10.0
libtpu: 0.0.40
codegen_flags: <defaults>
</compile_context>

<pallas_src>
import functools

import jax
import jax.numpy as jnp
from jax import lax
from jax.experimental import pallas as pl
from jax.experimental.pallas import tpu as pltpu


def _attention_pool_kernel(logits_ref, decision_ref, w_ref, b_ref, out_ref,
                           m_sc, den_sc, num_sc, *,
                           t_total, t_tile, has_time_pad):
    """One (batch-tile, time-tile) grid step.

    Online-softmax state (VMEM scratch, persists across the time grid axis):
      m_sc   (tb, Dout)  running max of clip(logits @ W + b) over time
      den_sc (tb, Dout)  running sum of exp(x - m)
      num_sc (tb, Dout)  running sum of decision * exp(x - m)
    """
    k = pl.program_id(1)

    @pl.when(k == 0)
    def _init():
        m_sc[...] = jnp.full(m_sc.shape, -jnp.inf, dtype=m_sc.dtype)
        den_sc[...] = jnp.zeros(den_sc.shape, den_sc.dtype)
        num_sc[...] = jnp.zeros(num_sc.shape, num_sc.dtype)

    tb, tt, din = logits_ref.shape
    dout = w_ref.shape[1]

    # Linear projection on the MXU: collapse (tb, tt) -> M. Operands stay in the
    # streamed dtype (bf16 by default -> full-rate MXU); accumulation is f32.
    x = jnp.dot(logits_ref[...].reshape(tb * tt, din), w_ref[...],
                preferred_element_type=jnp.float32)
    x = jnp.clip(x + b_ref[...], -15.0, 15.0).reshape(tb, tt, dout)
    decision = decision_ref[...].astype(jnp.float32)   # f32 elementwise (v5e-safe)

    def accumulate(x, decision):
        m_prev = m_sc[...]
        m_new = jnp.maximum(m_prev, jnp.max(x, axis=1))        # (tb, dout)
        rescale = jnp.exp(m_prev - m_new)                      # 0 at k == 0
        e = jnp.exp(x - m_new[:, None, :])                     # (tb, tt, dout)
        m_sc[...] = m_new
        den_sc[...] = den_sc[...] * rescale + jnp.sum(e, axis=1)
        num_sc[...] = num_sc[...] * rescale + jnp.sum(decision * e, axis=1)

    if has_time_pad:
        # T % tt != 0: the clipped edge DMA leaves garbage rows in the last time
        # tile. Only that tile pays for the mask; every other step takes the
        # unmasked branch (pure scalar predicate, no per-element iota/cmp/select).
        needs_mask = (k + 1) * t_tile > t_total

        @pl.when(needs_mask)
        def _masked_step():
            t_idx = k * t_tile + lax.broadcasted_iota(jnp.int32, (1, t_tile, 1), 1)
            valid = t_idx < t_total
            # Mask x BEFORE the running max (garbage bits may be NaN/inf) and zero
            # decision so NaN * 0 cannot leak into the numerator.
            accumulate(jnp.where(valid, x, -jnp.inf),
                       jnp.where(valid, decision, 0.0))

        @pl.when(jnp.logical_not(needs_mask))
        def _plain_step():
            accumulate(x, decision)
    else:
        accumulate(x, decision)

    @pl.when(k == pl.num_programs(1) - 1)
    def _finalize():
        # Reference: out = sum_t(d*w) / (sum_t(w) + eps) with sum_t(w) == 1,
        # i.e. num / (den * (1 + eps)). The +1e-30 guards the degenerate den == 0
        # case (empty sequence) where the reference yields 0, not NaN.
        den = den_sc[...]
        out_ref[...] = (num_sc[...] /
                        (den * (1.0 + 1e-07) + 1e-30)).astype(out_ref.dtype)


def _default_vmem_budget_bytes():
    # ~3/4 of physical VMEM, capped at 100 MiB:
    #   v5e / v6e (128 MiB physical) -> 96 MiB  (big tiles, deep pipeline)
    #   v7x       ( 64 MiB physical) -> 48 MiB  (headroom for double buffers)
    try:
        phys = int(pltpu.get_tpu_info().vmem_capacity_bytes)
    except Exception:
        phys = 64 * 1024 * 1024
    return min(phys * 3 // 4, 100 * 1024 * 1024)


def _choose_time_tile(T, Din, Dout, tb, in_itemsize, budget_bytes):
    """Largest time tile (multiple of 8, <= 512) whose footprint fits the budget."""
    if T <= 8:
        return T
    din_p = ((Din + 127) // 128) * 128      # lane padding inside VMEM tiles
    dout_p = ((Dout + 127) // 128) * 128
    fixed = (2 * (din_p * dout_p * in_itemsize + dout_p * 4)   # W + b
             + 5 * tb * dout_p * 4)                            # out block + scratch
    per_t = (2 * tb * (din_p + dout_p) * in_itemsize           # double-buffered inputs
             + 3 * tb * dout_p * 4)                            # f32 temporaries (x, e, d)
    avail = int(budget_bytes * 0.8) - fixed
    tt = avail // max(per_t, 1)
    tt = int(max(8, min(tt, 512)))
    tt = (tt // 8) * 8
    if tt >= T:
        return T
    return tt


def attention_pool(logits, decision, W, b, *, tb=None, tt=None,
                   input_dtype=jnp.bfloat16, vmem_budget_bytes=None):
    """Softmax(dim=1)-weighted pooling, matching PyTorch AttentionPool.forward."""
    B, T, Din = logits.shape
    Dout = W.shape[1]
    b = b.reshape(1, Dout)

    if vmem_budget_bytes is None:
        vmem_budget_bytes = _default_vmem_budget_bytes()

    # Stream the two big tensors (and the MXU weights) as bf16 by default: the
    # kernel is HBM-bound, so this halves the dominant byte traffic, and bf16
    # MXU operands run ~4-8x faster than f32 (accumulation stays f32).
    # These casts are no-ops when the caller already supplies `input_dtype`.
    if logits.dtype != input_dtype:
        logits = logits.astype(input_dtype)
    if decision.dtype != input_dtype:
        decision = decision.astype(input_dtype)
    W = W.astype(input_dtype)
    b = b.astype(jnp.float32)
    in_itemsize = jnp.dtype(input_dtype).itemsize

    # ---- batch tile (parallel axis) ----
    if tb is None:
        tb = B if B <= 8 else 8
    tb = min(tb, B)
    if tb != B:
        tb = max(8, (tb // 8) * 8)   # output-block sublane rule: multiple of 8 or == B
        if tb >= B:
            tb = B
    # TODO(synk): on v7x with B <= 8 a single batch tile leaves one TensorCore idle;
    # a finer split would need a sub-8 (sublane-masked) output block.

    # ---- time tile (sequential online-softmax reduction axis) ----
    if tt is None:
        tt = _choose_time_tile(T, Din, Dout, tb, in_itemsize, vmem_budget_bytes)
    tt = min(tt, T)
    if tt < T:
        tt = max(8, (tt // 8) * 8)   # multiple of 8 or the full time dim
        if tt >= T:
            tt = T

    grid = (pl.cdiv(B, tb), pl.cdiv(T, tt))
    has_time_pad = (grid[1] * tt != T)

    kernel = functools.partial(_attention_pool_kernel,
                               t_total=T, t_tile=tt, has_time_pad=has_time_pad)

    bytes_accessed = (logits.size * in_itemsize + decision.size * in_itemsize
                      + W.size * in_itemsize + b.size * 4 + B * Dout * 4)
    cost = pl.CostEstimate(
        flops=2 * B * T * Din * Dout + 10 * B * T * Dout,
        transcendentals=B * T * Dout + 2 * B * Dout * grid[1],
        bytes_accessed=bytes_accessed)

    out = pl.pallas_call(
        kernel,
        out_shape=jax.ShapeDtypeStruct((B, Dout), jnp.float32),
        grid_spec=pltpu.PrefetchScalarGridSpec(
            num_scalar_prefetch=0,
            grid=grid,
            in_specs=[
                # streamed, double-buffered tiles (native feature widths)
                pl.BlockSpec((tb, tt, Din), lambda i, k: (i, k, 0)),
                pl.BlockSpec((tb, tt, Dout), lambda i, k: (i, k, 0)),
                # weights: constant index_map -> DMA'd once, kept VMEM-resident
                pl.BlockSpec((Din, Dout), lambda i, k: (0, 0)),
                pl.BlockSpec((1, Dout), lambda i, k: (0, 0)),
            ],
            out_specs=pl.BlockSpec((tb, Dout), lambda i, k: (i, 0)),
            scratch_shapes=[
                pltpu.VMEM((tb, Dout), jnp.float32),   # running max
                pltpu.VMEM((tb, Dout), jnp.float32),   # running sum(exp)
                pltpu.VMEM((tb, Dout), jnp.float32),   # running sum(decision*exp)
            ]),
        compiler_params=pltpu.CompilerParams(
            # batch tiles shard across TensorCores (v7x megacore); the time axis
            # is the sequential online-softmax reduction.
            dimension_semantics=("parallel", "arbitrary"),
            vmem_limit_bytes=int(vmem_budget_bytes)),
        cost_estimate=cost,
    )(logits, decision, W, b)

    return out


def attention_pool_ref(logits, decision, W, b):
    x = jnp.clip(jnp.einsum("btd,de->bte", logits, W) + b[None], -15.0, 15.0)
    w = jax.nn.softmax(x, axis=1)
    return (decision * w).sum(1) / (w.sum(1) + 1e-07)


if __name__ == "__main__":
    B, T, Din, Dout = 2, 12, 32, 10

    key = jax.random.PRNGKey(0)
    k_logits, k_dec, k_w, k_b = jax.random.split(key, 4)

    logits = jax.random.normal(k_logits, (B, T, Din), dtype=jnp.float32)
    decision = jax.nn.sigmoid(
        jax.random.normal(k_dec, (B, T, Dout), dtype=jnp.float32))

    bound = 1.0 / (Din ** 0.5)
    W = jax.random.uniform(k_w, (Din, Dout), jnp.float32, -bound, bound)
    b = jax.random.uniform(k_b, (1, Dout), jnp.float32, -bound, bound)

    ref = attention_pool_ref(logits, decision, W, b)

    # 1) Default config: bf16 streaming + bf16 MXU, auto tile sizes (single time tile).
    out = jax.block_until_ready(attention_pool(logits, decision, W, b))
    assert out.shape == (B, Dout)
    assert jnp.allclose(out, ref, atol=2e-2, rtol=2e-2), (
        float(jnp.max(jnp.abs(out - ref))))

    # 2) f32 path with tt=8: exercises the multi-step online softmax and the
    #    clipped-edge time mask (T=12 not a multiple of 8), at tight tolerance.
    out32 = jax.block_until_ready(
        attention_pool(logits, decision, W, b, tt=8, input_dtype=jnp.float32))
    assert jnp.allclose(out32, ref, atol=1e-5, rtol=1e-5), (
        float(jnp.max(jnp.abs(out32 - ref))))

    # 3) Ragged batch edge: B=10 with tb=8 -> two batch tiles, second one clipped.
    B2 = 10
    logits2 = jax.random.normal(k_logits, (B2, T, Din), dtype=jnp.float32)
    decision2 = jax.nn.sigmoid(
        jax.random.normal(k_dec, (B2, T, Dout), dtype=jnp.float32))
    ref2 = attention_pool_ref(logits2, decision2, W, b)
    out2 = jax.block_until_ready(attention_pool(logits2, decision2, W, b, tt=8))
    assert out2.shape == (B2, Dout)
    assert jnp.allclose(out2, ref2, atol=2e-2, rtol=2e-2), (
        float(jnp.max(jnp.abs(out2 - ref2))))

    print("KERNEL_OK")
</pallas_src>

<mosaic_0001>
module attributes {stable_mosaic.version = 11 : i64} {
  func.func @_attention_pool_kernel(%arg0: i32, %arg1: i32, %arg2: memref<2x12x32xbf16, #tpu.memory_space<vmem>>, %arg3: memref<2x12x10xbf16, #tpu.memory_space<vmem>>, %arg4: memref<32x10xbf16, #tpu.memory_space<vmem>>, %arg5: memref<1x10xf32, #tpu.memory_space<vmem>>, %arg6: memref<2x10xf32, #tpu.memory_space<vmem>>, %arg7: memref<2x10xf32, #tpu.memory_space<vmem>>, %arg8: memref<2x10xf32, #tpu.memory_space<vmem>>, %arg9: memref<2x10xf32, #tpu.memory_space<vmem>>) attributes {dimension_semantics = [#tpu.dimension_semantics<parallel>, #tpu.dimension_semantics<arbitrary>], iteration_bounds = array<i64: 1, 1>, scalar_prefetch = 0 : i64, scratch_operands = 3 : i64, tpu.core_type = #tpu.core_type<tc>, window_params = [{transform_indices = @transform_0, window_bounds = array<i64: 2, 12, 32>}, {transform_indices = @transform_1, window_bounds = array<i64: 2, 12, 10>}, {pipeline_mode = #tpu.pipeline_mode<synchronous>, transform_indices = @transform_2, window_bounds = array<i64: 32, 10>}, {pipeline_mode = #tpu.pipeline_mode<synchronous>, transform_indices = @transform_3, window_bounds = array<i64: 1, 10>}, {transform_indices = @transform_4, window_bounds = array<i64: 2, 10>}]} {
    %c0_i32 = arith.constant 0 : i32
    %0 = arith.cmpi eq, %arg1, %c0_i32 : i32
    %1 = arith.extui %0 : i1 to i32
    %c0_i32_0 = arith.constant 0 : i32
    %2 = arith.cmpi ne, %1, %c0_i32_0 : i32
    scf.if %2 {
      %cst_29 = arith.constant 0xFF800000 : f32
      %41 = vector.broadcast %cst_29 : f32 to vector<2x10xf32>
      %c0_30 = arith.constant 0 : index
      %c0_31 = arith.constant 0 : index
      %42 = vector.load %arg7[%c0_30, %c0_31] : memref<2x10xf32, #tpu.memory_space<vmem>>, vector<2x10xf32>
      tpu.vector_store %arg7[%c0_30, %c0_31], %41 {strides = array<i32>} : memref<2x10xf32, #tpu.memory_space<vmem>>, vector<2x10xf32>,
      %cst_32 = arith.constant 0.000000e+00 : f32
      %43 = vector.broadcast %cst_32 : f32 to vector<2x10xf32>
      %c0_33 = arith.constant 0 : index
      %c0_34 = arith.constant 0 : index
      %44 = vector.load %arg8[%c0_33, %c0_34] : memref<2x10xf32, #tpu.memory_space<vmem>>, vector<2x10xf32>
      tpu.vector_store %arg8[%c0_33, %c0_34], %43 {strides = array<i32>} : memref<2x10xf32, #tpu.memory_space<vmem>>, vector<2x10xf32>,
      %cst_35 = arith.constant 0.000000e+00 : f32
      %45 = vector.broadcast %cst_35 : f32 to vector<2x10xf32>
      %c0_36 = arith.constant 0 : index
      %c0_37 = arith.constant 0 : index
      %46 = vector.load %arg9[%c0_36, %c0_37] : memref<2x10xf32, #tpu.memory_space<vmem>>, vector<2x10xf32>
      tpu.vector_store %arg9[%c0_36, %c0_37], %45 {strides = array<i32>} : memref<2x10xf32, #tpu.memory_space<vmem>>, vector<2x10xf32>,
    } else {
    }
    %c0 = arith.constant 0 : index
    %c0_1 = arith.constant 0 : index
    %c0_2 = arith.constant 0 : index
    %3 = vector.load %arg2[%c0, %c0_1, %c0_2] : memref<2x12x32xbf16, #tpu.memory_space<vmem>>, vector<2x12x32xbf16>
    %4 = vector.shape_cast %3 : vector<2x12x32xbf16> to vector<24x32xbf16>
    %c0_3 = arith.constant 0 : index
    %c0_4 = arith.constant 0 : index
    %5 = vector.load %arg4[%c0_3, %c0_4] : memref<32x10xbf16, #tpu.memory_space<vmem>>, vector<32x10xbf16>
    %cst = arith.constant dense<0.000000e+00> : vector<24x10xf32>
    %6 = tpu.matmul %4, %5, %cst {dimension_numbers = #tpu.dot_dimension_numbers<[1], [0], [0], [1], [0, 0, 1, 1], [], []>} : vector<24x32xbf16>, vector<32x10xbf16>, vector<24x10xf32> -> vector<24x10xf32>
    %c0_5 = arith.constant 0 : index
    %c0_6 = arith.constant 0 : index
    %7 = vector.load %arg5[%c0_5, %c0_6] : memref<1x10xf32, #tpu.memory_space<vmem>>, vector<1x10xf32>
    %8 = vector.broadcast %7 : vector<1x10xf32> to vector<24x10xf32>
    %9 = arith.addf %6, %8 : vector<24x10xf32>
    %cst_7 = arith.constant -1.500000e+01 : f32
    %cst_8 = arith.constant 1.500000e+01 : f32
    %10 = vector.broadcast %cst_7 : f32 to vector<24x10xf32>
    %11 = arith.maximumf %10, %9 : vector<24x10xf32>
    %12 = vector.broadcast %cst_8 : f32 to vector<24x10xf32>
    %13 = arith.minimumf %12, %11 : vector<24x10xf32>
    %14 = vector.shape_cast %13 : vector<24x10xf32> to vector<2x12x10xf32>
    %c0_9 = arith.constant 0 : index
    %c0_10 = arith.constant 0 : index
    %c0_11 = arith.constant 0 : index
    %15 = vector.load %arg3[%c0_9, %c0_10, %c0_11] : memref<2x12x10xbf16, #tpu.memory_space<vmem>>, vector<2x12x10xbf16>
    %16 = arith.extf %15 : vector<2x12x10xbf16> to vector<2x12x10xf32>
    %c0_12 = arith.constant 0 : index
    %c0_13 = arith.constant 0 : index
    %17 = vector.load %arg7[%c0_12, %c0_13] : memref<2x10xf32, #tpu.memory_space<vmem>>, vector<2x10xf32>
    %cst_14 = arith.constant dense<0xFF800000> : vector<2x10xf32>
    %18 = vector.multi_reduction <maximumf>, %14, %cst_14 [1] : vector<2x12x10xf32> to vector<2x10xf32>
    %19 = arith.maximumf %17, %18 : vector<2x10xf32>
    %20 = arith.subf %17, %19 : vector<2x10xf32>
    %21 = math.exp %20 : vector<2x10xf32>
    %22 = vector.shape_cast %19 : vector<2x10xf32> to vector<2x1x10xf32>
    %23 = vector.broadcast %22 : vector<2x1x10xf32> to vector<2x12x10xf32>
    %24 = arith.subf %14, %23 : vector<2x12x10xf32>
    %25 = math.exp %24 : vector<2x12x10xf32>
    %c0_15 = arith.constant 0 : index
    %c0_16 = arith.constant 0 : index
    %26 = vector.load %arg7[%c0_15, %c0_16] : memref<2x10xf32, #tpu.memory_space<vmem>>, vector<2x10xf32>
    tpu.vector_store %arg7[%c0_15, %c0_16], %19 {strides = array<i32>} : memref<2x10xf32, #tpu.memory_space<vmem>>, vector<2x10xf32>,
    %c0_17 = arith.constant 0 : index
    %c0_18 = arith.constant 0 : index
    %27 = vector.load %arg8[%c0_17, %c0_18] : memref<2x10xf32, #tpu.memory_space<vmem>>, vector<2x10xf32>
    %28 = arith.mulf %27, %21 : vector<2x10xf32>
    %cst_19 = arith.constant dense<0.000000e+00> : vector<2x10xf32>
    %29 = vector.multi_reduction <add>, %25, %cst_19 [1] : vector<2x12x10xf32> to vector<2x10xf32>
    %30 = arith.addf %28, %29 : vector<2x10xf32>
    %c0_20 = arith.constant 0 : index
    %c0_21 = arith.constant 0 : index
    %31 = vector.load %arg8[%c0_20, %c0_21] : memref<2x10xf32, #tpu.memory_space<vmem>>, vector<2x10xf32>
    tpu.vector_store %arg8[%c0_20, %c0_21], %30 {strides = array<i32>} : memref<2x10xf32, #tpu.memory_space<vmem>>, vector<2x10xf32>,
    %c0_22 = arith.constant 0 : index
    %c0_23 = arith.constant 0 : index
    %32 = vector.load %arg9[%c0_22, %c0_23] : memref<2x10xf32, #tpu.memory_space<vmem>>, vector<2x10xf32>
    %33 = arith.mulf %32, %21 : vector<2x10xf32>
    %34 = arith.mulf %16, %25 : vector<2x12x10xf32>
    %cst_24 = arith.constant dense<0.000000e+00> : vector<2x10xf32>
    %35 = vector.multi_reduction <add>, %34, %cst_24 [1] : vector<2x12x10xf32> to vector<2x10xf32>
    %36 = arith.addf %33, %35 : vector<2x10xf32>
    %c0_25 = arith.constant 0 : index
    %c0_26 = arith.constant 0 : index
    %37 = vector.load %arg9[%c0_25, %c0_26] : memref<2x10xf32, #tpu.memory_space<vmem>>, vector<2x10xf32>
    tpu.vector_store %arg9[%c0_25, %c0_26], %36 {strides = array<i32>} : memref<2x10xf32, #tpu.memory_space<vmem>>, vector<2x10xf32>,
    %c0_i32_27 = arith.constant 0 : i32
    %38 = arith.cmpi eq, %arg1, %c0_i32_27 : i32
    %39 = arith.extui %38 : i1 to i32
    %c0_i32_28 = arith.constant 0 : i32
    %40 = arith.cmpi ne, %39, %c0_i32_28 : i32
    scf.if %40 {
      %c0_29 = arith.constant 0 : index
      %c0_30 = arith.constant 0 : index
      %41 = vector.load %arg8[%c0_29, %c0_30] : memref<2x10xf32, #tpu.memory_space<vmem>>, vector<2x10xf32>
      %c0_31 = arith.constant 0 : index
      %c0_32 = arith.constant 0 : index
      %42 = vector.load %arg9[%c0_31, %c0_32] : memref<2x10xf32, #tpu.memory_space<vmem>>, vector<2x10xf32>
      %cst_33 = arith.constant 1.00000012 : f32
      %43 = vector.broadcast %cst_33 : f32 to vector<2x10xf32>
      %44 = arith.mulf %41, %43 : vector<2x10xf32>
      %cst_34 = arith.constant 1.000000e-30 : f32
      %45 = vector.broadcast %cst_34 : f32 to vector<2x10xf32>
      %46 = arith.addf %44, %45 : vector<2x10xf32>
      %47 = arith.divf %42, %46 : vector<2x10xf32>
      %c0_35 = arith.constant 0 : index
      %c0_36 = arith.constant 0 : index
      %48 = vector.load %arg6[%c0_35, %c0_36] : memref<2x10xf32, #tpu.memory_space<vmem>>, vector<2x10xf32>
      tpu.vector_store %arg6[%c0_35, %c0_36], %47 {strides = array<i32>} : memref<2x10xf32, #tpu.memory_space<vmem>>, vector<2x10xf32>,
    } else {
    }
    return
  }
  func.func @transform_0(%arg0: i32, %arg1: i32) -> (i32, i32, i32) {
    %c0_i32 = arith.constant 0 : i32
    %c0_i32_0 = arith.constant 0 : i32
    return %arg0, %arg1, %c0_i32 : i32, i32, i32
  }
  func.func @transform_1(%arg0: i32, %arg1: i32) -> (i32, i32, i32) {
    %c0_i32 = arith.constant 0 : i32
    %c0_i32_0 = arith.constant 0 : i32
    return %arg0, %arg1, %c0_i32 : i32, i32, i32
  }
  func.func @transform_2(%arg0: i32, %arg1: i32) -> (i32, i32) {
    %c0_i32 = arith.constant 0 : i32
    %c0_i32_0 = arith.constant 0 : i32
    %c0_i32_1 = arith.constant 0 : i32
    return %c0_i32, %c0_i32_0 : i32, i32
  }
  func.func @transform_3(%arg0: i32, %arg1: i32) -> (i32, i32) {
    %c0_i32 = arith.constant 0 : i32
    %c0_i32_0 = arith.constant 0 : i32
    %c0_i32_1 = arith.constant 0 : i32
    return %c0_i32, %c0_i32_0 : i32, i32
  }
  func.func @transform_4(%arg0: i32, %arg1: i32) -> (i32, i32) {
    %c0_i32 = arith.constant 0 : i32
    %c0_i32_0 = arith.constant 0 : i32
    return %arg0, %c0_i32 : i32, i32
  }
}

</mosaic_0001>

<llo_original>
// kernel: tpu_custom_call.1
$region0: #{tpu_custom_call.1}
  #allocation0 [shape = 'u32[]', space=smem, size = 0x4, offset = 0x4, fixed_abs, tag = 'smem constant byte address 0x4 - core index']
  #allocation1 [shape = 'u32[144,128]{1,0:T(1,128)}', space=vmem, size = 0x12000, scoped, tag = 'internal scratch']
  #allocation2 [shape = 'f32[2,10]{1,0:T(2,128)}', space=vmem, size = 0x400, scoped, tag = 'scratch operand']
  #allocation3 [shape = 'f32[2,10]{1,0:T(2,128)}', space=vmem, size = 0x400, scoped, tag = 'scratch operand']
  #allocation4 [shape = 'f32[2,10]{1,0:T(2,128)}', space=vmem, size = 0x400, scoped, tag = 'scratch operand']
  %s0 = inlined_call_operand.vmem [shape: bf16[2,12,32], index: 0, kind: input, shape index: {}]
  %s1 = inlined_call_operand.vmem [shape: bf16[2,12,10], index: 1, kind: input, shape index: {}]
  %s2 = inlined_call_operand.vmem [shape: bf16[32,10], index: 2, kind: input, shape index: {}]
  %s3 = inlined_call_operand.vmem [shape: f32[1,10], index: 3, kind: input, shape index: {}]
  %s4 = inlined_call_operand.hbm [shape: f32[2,10], index: 4, kind: output, shape index: {}]
  %s5 = sld [smem:[#allocation0]]
  $region34: #{tpu_custom_call.1} parent=0
    _
  %s7 = ssub.s32 1, %s5
  %s8 = scalar_select 0, %s7, %s5
  $region1: #{tpu_custom_call.1} parent=0
    #allocation5 [shape = 'u8[1024]{0}', space=vmem, size = 0x400, scoped, tag = 'output window, operand 0, single buffered']
    #allocation6 [shape = 's32[1]{0}', space=sflag, size = 0x4, scoped, tag = 'scoped memory for tpu_custom_call.1']
    %9 = vsyncpa [#allocation6], 0
    // Predicated region
    $region2: #{tpu_custom_call.1} parent=1 // pred_check
      _
    $region3: #{tpu_custom_call.1} parent=1 // pred_check_branch
      %11 = sbr.rel (0) target = $region5
    $region4: #{tpu_custom_call.1} parent=1 // pred_region
      _
    $region5: #{tpu_custom_call.1} parent=1 // pred_fallthru
      _
    // Predicated region
    $region6: #{tpu_custom_call.1} parent=1 // pred_check
      _
    $region7: #{tpu_custom_call.1} parent=1 // pred_check_branch
      %13 = sbr.rel (0) target = $region9
    $region8: #{tpu_custom_call.1} parent=1 // pred_region
      _
    $region9: #{tpu_custom_call.1} parent=1 // pred_fallthru
      _
    // Predicated region
    $region10: #{tpu_custom_call.1} parent=1 // pred_check
      _
    $region11: #{tpu_custom_call.1} parent=1 // pred_check_branch
      %15 = sbr.rel (0) target = $region13
    $region12: #{tpu_custom_call.1} parent=1 // pred_region
      _
    $region13: #{tpu_custom_call.1} parent=1 // pred_fallthru
      _
    // Predicated region
    $region14: #{tpu_custom_call.1} parent=1 // pred_check
      _
    $region15: #{tpu_custom_call.1} parent=1 // pred_check_branch
      %17 = sbr.rel (0) target = $region17
    $region16: #{tpu_custom_call.1} parent=1 // pred_region
      _
    $region17: #{tpu_custom_call.1} parent=1 // pred_fallthru
      _
    %p19 = scmp.eq.s32.totalorder 0, 0
    // Predicated region
    $region18: #{tpu_custom_call.1} parent=1 // pred_check
      %p20 = pneg %p19
    $region19: #{tpu_custom_call.1} parent=1 // pred_check_branch
      %22 = sbr.rel (%p20) target = $region21
    $region20: #{tpu_custom_call.1} parent=1 // pred_region
      %vm23 = vcmask 74752
      %24 = vst.msk [vmem:[#allocation2] sm:$0x3] %vm23, -inf
      %25 = vst.msk [vmem:[#allocation3] sm:$0x3] %vm23, 0.0
      %26 = vst.msk [vmem:[#allocation4] sm:$0x3] %vm23, 0.0
    $region21: #{tpu_custom_call.1} parent=1 // pred_fallthru
      _
    %v27 = vld [vmem:[%s0] sm:$0xf]
    %v28 = vld [vmem:[%s0 + $0x4] sm:$0x3]
    %v29 = vld [vmem:[%s0 + $0x8] sm:$0xf]
    %v30 = vld [vmem:[%s0 + $0xc] sm:$0x3]
    %v36 = vunpack.c.l.s4 1983009808
    %v37 = vunpack.c.0.s8 %v36
    %v38 = vlaneseq
    %v39 = vshrl.u32 %v38, 7
    %v40 = vsub.s32 %v37, %v39
    %v41 = vrot.slane %v27, %v40
    %v42 = vcombine.high %v41, %v41
    %v44 = vunpack.c.l.s4 1983009808
    %v45 = vunpack.c.0.s8 %v44
    %v46 = vlaneseq
    %v47 = vshrl.u32 %v46, 7
    %v48 = vsub.s32 %v45, %v47
    %v49 = vrot.slane %v28, %v48
    %v51 = vunpack.c.l.s4 1983009808
    %v52 = vunpack.c.0.s8 %v51
    %v53 = vlaneseq
    %v54 = vshrl.u32 %v53, 7
    %v55 = vsub.s32 %v52, %v54
    %v56 = vrot.slane %v29, %v55
    %v57 = vcombine.high %v56, %v56
    %v59 = vunpack.c.l.s4 1983009808
    %v60 = vunpack.c.0.s8 %v59
    %v61 = vlaneseq
    %v62 = vshrl.u32 %v61, 7
    %v63 = vsub.s32 %v60, %v62
    %v64 = vrot.slane %v30, %v63
    %v65 = vld [vmem:[%s2] sm:$0xf]
    %v66 = vld [vmem:[%s2 + $0x4] sm:$0xf]
    %v67 = vld [vmem:[%s2 + $0x8] sm:$0xf]
    %v68 = vld [vmem:[%s2 + $0xc] sm:$0xf]
    %v69 = vld [vmem:[%s3] sm:$0x1]
    %v71 = vlaneseq
    %v72 = vshrl.u32 %v71, 7
    %v73 = vsub.s32 0, %v72
    %v74 = vrot.slane %v69, %v73
    %v76 = vcombine.low %v41, %v42
    %v77 = vcombine.low %v49, %v56
    %v79 = vunpack.c.l.s4 1983009808
    %v80 = vunpack.c.0.s8 %v79
    %v81 = vlaneseq
    %v82 = vshrl.u32 %v81, 7
    %v83 = vsub.s32 %v80, %v82
    %v84 = vrot.slane %v76, %v83
    %v86 = vunpack.c.l.s4 1983009808
    %v87 = vunpack.c.0.s8 %v86
    %v88 = vlaneseq
    %v89 = vshrl.u32 %v88, 7
    %v90 = vsub.s32 %v87, %v89
    %v91 = vrot.slane %v77, %v90
    %v92 = vcombine.low %v84, %v91
    %v93 = vcombine.low %v57, %v64
    %v95 = vunpack.c.l.s4 1983009808
    %v96 = vunpack.c.0.s8 %v95
    %v97 = vlaneseq
    %v98 = vshrl.u32 %v97, 7
    %v99 = vsub.s32 %v96, %v98
    %v100 = vrot.slane %v93, %v99
    %v105 = vunpack.c.l.b16 %v65
    %v106 = vunpack.c.l.b16 %v66
    %v107 = vunpack.c.l.b16 %v67
    %v108 = vunpack.c.l.b16 %v68
    %v109 = vpack.c.b16 %v106, %v105
    %v110 = vpack.c.b16 %v108, %v107
    %vm113 = vcmask 261120
    %v115 = vsel %vm113, %v92, 0
    %v118 = vsel %vm113, %v100, 0
    %120 = vmatprep.subr.bf16.mxu0 0
    %121 = vmatpush1.bf16.msra.mxu0 %v109
    %122 = vmatprep.subr.bf16.mxu0 0
    %123 = vmatpush1.bf16.msra.mxu0 %v110
    %124 = vmatprep.subr.bf16.mxu0 0
    %125 = vmatpush1.bf16.msra.mxu0 0
    %126 = vmatprep.subr.bf16.mxu0 0
    %127 = vmatpush1.bf16.msra.mxu0 0
    %128 = vmatprep.subr.bf16.mxu0 0
    %129 = vmatpush1.bf16.msra.mxu0 0
    %130 = vmatprep.subr.bf16.mxu0 0
    %131 = vmatpush1.bf16.msra.mxu0 0
    %132 = vmatprep.subr.bf16.mxu0 0
    %133 = vmatpush1.bf16.msra.mxu0 0
    %134 = vmatprep.subr.bf16.mxu0 0
    %135 = vmatpush1.bf16.msra.mxu0 0
    %136 = vmatprep.subr.bf16.mxu0 0
    %137 = vmatpush1.bf16.msra.mxu0 0
    %138 = vmatprep.subr.bf16.mxu0 0
    %139 = vmatpush1.bf16.msra.mxu0 0
    %140 = vmatprep.subr.bf16.mxu0 0
    %141 = vmatpush1.bf16.msra.mxu0 0
    %142 = vmatprep.subr.bf16.mxu0 0
    %143 = vmatpush1.bf16.msra.mxu0 0
    %144 = vmatprep.subr.bf16.mxu0 0
    %145 = vmatpush1.bf16.msra.mxu0 0
    %146 = vmatprep.subr.bf16.mxu0 0
    %147 = vmatpush1.bf16.msra.mxu0 0
    %148 = vmatprep.subr.bf16.mxu0 0
    %149 = vmatpush1.bf16.msra.mxu0 0
    %150 = vmatprep.subr.bf16.mxu0 0
    %151 = vmatpush1.bf16.msra.mxu0 0
    %152 = vmatprep.mubr.bf16.mxu0 0
    %153 = vmatmul.mubr.bf16.gmra.mrb[0].mxu0 %v115
    %v154 = vpop.f32.mrb[0].mxu0
    %v155 = vadd.f32 %v74, %v154
    %v156 = vpop.f32.mrb[0].mxu0
    %v157 = vpop.f32.mrb[0].mxu0
    %v158 = vadd.f32 %v74, %v157
    %v159 = vpop.f32.mrb[0].mxu0
    %160 = vmatprep.mubr.bf16.mxu0 0
    %161 = vmatmul.mubr.bf16.gmra.mrb[0].mxu0 %v118
    %v162 = vpop.f32.mrb[0].mxu0
    %v163 = vadd.f32 %v74, %v162
    %v164 = vpop.f32.mrb[0].mxu0
    %v165 = vpop.f32.mrb[0].mxu0
    %v166 = vpop.f32.mrb[0].mxu0
    %167 = vdwg.mxu0
    %v168 = vmax.f32 %v155, -15.0
    %v169 = vmax.f32 %v158, -15.0
    %v170 = vmax.f32 %v163, -15.0
    %v171 = vmin.f32 %v168, 15.0
    %v172 = vmin.f32 %v169, 15.0
    %v173 = vmin.f32 %v170, 15.0
    %v177 = vcombine.high %v171, %v171
    %v178 = vcombine.high %v172, %v172
    %v179 = vcombine.high %v173, %v173
    %v183 = vld [vmem:[%s1] sm:$0xf]
    %v184 = vld [vmem:[%s1 + $0x4] sm:$0x3]
    %v185 = vld [vmem:[%s1 + $0x8] sm:$0xf]
    %v186 = vld [vmem:[%s1 + $0xc] sm:$0x3]
    %v187 = vunpack.c.l.bf16 %v183
    %v188 = vunpack.c.l.bf16 %v184
    %v189 = vunpack.c.l.bf16 %v185
    %v190 = vunpack.c.l.bf16 %v186
    %v191 = vld [vmem:[#allocation2] sm:$0x3]
    %v192 = vcombine.low %v171, %v177
    %v193 = vcombine.low %v178, %v173
    %vm196 = vcmask 80896
    %v197 = vsel %vm196, %v192, -inf
    %vm198 = vcmask 76800
    %v199 = vsel %vm198, %v172, -inf
    %v200 = vmax.f32 %v197, %v199
    %v201 = vrot.slane %v200, 4
    %v202 = vmax.f32 %v200, %v201
    %v203 = vrot.slane %v202, 2
    %v204 = vmax.f32 %v202, %v203
    %v205 = vrot.slane %v204, 1
    %v206 = vmax.f32 %v204, %v205
    %v207 = vsel %vm196, %v193, -inf
    %v208 = vsel %vm198, %v179, -inf
    %v209 = vmax.f32 %v207, %v208
    %v210 = vrot.slane %v209, 4
    %v211 = vmax.f32 %v209, %v210
    %v212 = vrot.slane %v211, 2
    %v213 = vmax.f32 %v211, %v212
    %v214 = vrot.slane %v213, 1
    %v215 = vmax.f32 %v213, %v214
    %vm218 = vcmask 1041409
    %v219 = vsel %vm218, %v215, %v206
    %v221 = vmax.f32 %v191, %v219
    %v222 = vsub.f32 %v191, %v221
    %v223 = vmul.f32 %v222, 1.442695
    %v224 = vpow.pop %v223
    %v227 = vunpack.c.l.s4 1966171168
    %v228 = vunpack.c.0.s8 %v227
    %v229 = vlaneseq
    %v230 = vshrl.u32 %v229, 7
    %v231 = vsub.s32 %v228, %v230
    %v232 = vrot.slane %v221, %v231
    %v233 = vcombine.high %v232, %v232
    %v235 = vunpack.c.l.s4 1966171168
    %v236 = vunpack.c.0.s8 %v235
    %v237 = vlaneseq
    %v238 = vshrl.u32 %v237, 7
    %v239 = vsub.s32 %v236, %v238
    %v240 = vrot.slane %v232, %v239
    %v242 = vunpack.c.l.s4 1966171168
    %v243 = vunpack.c.0.s8 %v242
    %v244 = vlaneseq
    %v245 = vshrl.u32 %v244, 7
    %v246 = vsub.s32 %v243, %v245
    %v247 = vrot.slane %v233, %v246
    %v248 = vlaneseq
    %v249 = vshrl.u32 %v248, 7
    %v250 = vsub.s32 0, %v249
    %v251 = vrot.slane %v240, %v250
    %v252 = vlaneseq
    %v253 = vshrl.u32 %v252, 7
    %v254 = vsub.s32 0, %v253
    %v255 = vrot.slane %v247, %v254
    %v258 = vcombine.high %v251, %v251
    %v259 = vcombine.high %v255, %v255
    %v262 = vsub.f32 %v171, %v251
    %v263 = vsub.f32 %v177, %v258
    %v264 = vsub.f32 %v172, %v251
    %v265 = vsub.f32 %v178, %v255
    %v266 = vsub.f32 %v173, %v259
    %v267 = vsub.f32 %v179, %v255
    %v268 = vmul.f32 %v262, 1.442695
    %v269 = vpow.pop %v268
    %v270 = vmul.f32 %v263, 1.442695
    %v271 = vpow.pop %v270
    %v272 = vmul.f32 %v264, 1.442695
    %v273 = vpow.pop %v272
    %v274 = vmul.f32 %v265, 1.442695
    %v275 = vpow.pop %v274
    %v276 = vmul.f32 %v266, 1.442695
    %v277 = vpow.pop %v276
    %v278 = vmul.f32 %v267, 1.442695
    %v279 = vpow.pop %v278
    %vm280 = vcmask 74752
    %281 = vst.msk [vmem:[#allocation2] sm:$0x3] %vm280, %v221
    %v282 = vld [vmem:[#allocation3] sm:$0x3]
    %v283 = vmul.f32 %v282, %v224
    %v288 = vcombine.low %v269, %v271
    %v289 = vcombine.low %v275, %v277
    %v292 = vsel %vm196, %v288, 0.0
    %v293 = vsel %vm198, %v273, 0.0
    %v294 = vadd.f32 %v292, %v293
    %v295 = vrot.slane %v294, 4
    %v296 = vadd.f32 %v294, %v295
    %v297 = vrot.slane %v296, 2
    %v298 = vadd.f32 %v296, %v297
    %v299 = vrot.slane %v298, 1
    %v300 = vadd.f32 %v298, %v299
    %v301 = vsel %vm196, %v289, 0.0
    %v302 = vsel %vm198, %v279, 0.0
    %v303 = vadd.f32 %v301, %v302
    %v304 = vrot.slane %v303, 4
    %v305 = vadd.f32 %v303, %v304
    %v306 = vrot.slane %v305, 2
    %v307 = vadd.f32 %v305, %v306
    %v308 = vrot.slane %v307, 1
    %v309 = vadd.f32 %v307, %v308
    %v312 = vsel %vm218, %v309, %v300
    %v314 = vadd.f32 %v283, %v312
    %315 = vst.msk [vmem:[#allocation3] sm:$0x3] %vm280, %v314
    %v316 = vld [vmem:[#allocation4] sm:$0x3]
    %v317 = vmul.f32 %v316, %v224
    %v318 = vmul.f32 %v187, %v288
    %v319 = vmul.f32 %v188, %v273
    %v320 = vmul.f32 %v189, %v289
    %v321 = vmul.f32 %v190, %v279
    %v322 = vsel %vm196, %v318, 0.0
    %v323 = vsel %vm198, %v319, 0.0
    %v324 = vadd.f32 %v322, %v323
    %v325 = vrot.slane %v324, 4
    %v326 = vadd.f32 %v324, %v325
    %v327 = vrot.slane %v326, 2
    %v328 = vadd.f32 %v326, %v327
    %v329 = vrot.slane %v328, 1
    %v330 = vadd.f32 %v328, %v329
    %v331 = vsel %vm196, %v320, 0.0
    %v332 = vsel %vm198, %v321, 0.0
    %v333 = vadd.f32 %v331, %v332
    %v334 = vrot.slane %v333, 4
    %v335 = vadd.f32 %v333, %v334
    %v336 = vrot.slane %v335, 2
    %v337 = vadd.f32 %v335, %v336
    %v338 = vrot.slane %v337, 1
    %v339 = vadd.f32 %v337, %v338
    %v342 = vsel %vm218, %v339, %v330
    %v344 = vadd.f32 %v317, %v342
    %345 = vst.msk [vmem:[#allocation4] sm:$0x3] %vm280, %v344
    // Predicated region
    $region22: #{tpu_custom_call.1} parent=1 // pred_check
      %p346 = pneg %p19
    $region23: #{tpu_custom_call.1} parent=1 // pred_check_branch
      %348 = sbr.rel (%p346) target = $region25
    $region24: #{tpu_custom_call.1} parent=1 // pred_region
      %v349 = vld [vmem:[#allocation3] sm:$0x3]
      %v350 = vld [vmem:[#allocation4] sm:$0x3]
      %v351 = vmul.f32 %v349, 1.0000001
      %v352 = vadd.f32 %v351, 1e-30
      %v353 = vrcp.pop %v352
      %v354 = vmul.f32 %v350, %v353
      %355 = vst.msk [vmem:[#allocation5] sm:$0x3] %vm280, %v354
    $region25: #{tpu_custom_call.1} parent=1 // pred_fallthru
      _
    // Predicated region
    $region26: #{tpu_custom_call.1} parent=1 // pred_check
      _
    $region27: #{tpu_custom_call.1} parent=1 // pred_check_branch
      %357 = sbr.rel (0) target = $region29
    $region28: #{tpu_custom_call.1} parent=1 // pred_region
      %s359 = ssub.s32 32, 32
      %360 = vsyncadd [#allocation6], %s359
      %s362 = sshll.u32 [#allocation5], 4
      %s363 = int_to_ptr.vmem [resolvable:$true] %s362
      %365 = dma.vmem_to_hbm [thread:$0]  %s363, 32, %s4, [#allocation6]
    $region29: #{tpu_custom_call.1} parent=1 // pred_fallthru
      _
    // Predicated region
    $region30: #{tpu_custom_call.1} parent=1 // pred_check
      _
    $region31: #{tpu_custom_call.1} parent=1 // pred_check_branch
      %367 = sbr.rel (0) target = $region33
    $region32: #{tpu_custom_call.1} parent=1 // pred_region
      %368 = dma.done [#allocation6], 32
    $region33: #{tpu_custom_call.1} parent=1 // pred_fallthru
      _
    %369 = vsyncpa [#allocation6], 1

</llo_original>
